<compile_context>
chip_gen: v5e
topology: v5e:2x2
jax: 0.10.0
libtpu: 0.0.40
codegen_flags: <defaults>
</compile_context>

<pallas_src>
import jax
import jax.numpy as jnp
from jax.experimental import pallas as pl
from jax.experimental.pallas import tpu as pltpu


def _first_feature_kernel(x_ref, w_ref, o_ref):
    # x_ref: (bn, C_in, TS)   spatial tile; channels on sublanes, spatial on lanes
    # w_ref: (C_out, C_in)    full (tiny) weight, resident every step
    # o_ref: (bn, C_out, TS)
    x = x_ref[...].astype(jnp.float32)      # (bn, C_in, TS)
    w = w_ref[...].astype(jnp.float32)      # (C_out, C_in)
    c_in = x.shape[1]

    # VPU formulation, unrolled over the tiny C_in axis:
    #   (1, C_out, 1) lane/batch-broadcast * (bn, 1, TS) sublane-broadcast
    acc = w[None, :, 0:1] * x[:, 0:1, :]
    for c in range(1, c_in):
        acc = acc + w[None, :, c:c + 1] * x[:, c:c + 1, :]

    # Fused LeakyReLU (slope 0.01, PyTorch default). max(y, 0.01*y) == leaky_relu(y).
    o_ref[...] = jnp.maximum(acc, 0.01 * acc).astype(o_ref.dtype)


def _choose_tiling(n, c_in, c_out, s, elem_bytes, vmem_block_budget_bytes):
    """Pick (bn, tile_s) so the double-buffered block footprint fits the budget."""
    # Double-buffered in+out blocks per grid step:
    #   2 * bn * (c_in + c_out) * tile_s * elem_bytes
    per_elem = 2 * (c_in + c_out) * elem_bytes
    budget_elems = max(128, vmem_block_budget_bytes // per_elem)  # bn * tile_s

    if s <= budget_elems:
        tile_s = s                                   # full-extent spatial block
        bn = max(1, min(n, budget_elems // s))       # fold batch into the block
        if n >= 2:
            # Keep >= 2 batch grid steps so both v7x TensorCores receive work.
            bn = min(bn, -(-n // 2))
    else:
        tile_s = (budget_elems // 128) * 128         # lane-aligned spatial tile
        bn = 1
    return bn, tile_s


def first_feature_forward(x_nchw, weight_oi, *, vmem_block_budget_bytes=8 << 20):
    """nn.Conv2d(in, out, 1, 1, 0, bias=False) + nn.LeakyReLU(), NCHW in/out.

    x_nchw:    (N, C_in, H, W)
    weight_oi: (C_out, C_in)   -- the (C_out, C_in, 1, 1) conv weight squeezed.
    returns:   (N, C_out, H, W)
    """
    n, c_in, h, w = x_nchw.shape
    c_out = weight_oi.shape[0]
    s = h * w
    elem_bytes = jnp.dtype(x_nchw.dtype).itemsize

    # (N, C_in, H, W) -> (N, C_in, S): contiguous, free view (no transpose/copy).
    x3 = x_nchw.reshape(n, c_in, s)

    bn, tile_s = _choose_tiling(n, c_in, c_out, s, elem_bytes,
                                vmem_block_budget_bytes)
    grid = (pl.cdiv(n, bn), pl.cdiv(s, tile_s))

    # Advisory cost: this op is memory bound (AI ~ 1.3 flop/byte).
    cost = pl.CostEstimate(
        flops=2 * n * s * c_in * c_out + 2 * n * s * c_out,
        transcendentals=0,
        bytes_accessed=(n * c_in * s + n * c_out * s) * elem_bytes
        + weight_oi.size * jnp.dtype(weight_oi.dtype).itemsize,
    )

    out3 = pl.pallas_call(
        _first_feature_kernel,
        out_shape=jax.ShapeDtypeStruct((n, c_out, s), x_nchw.dtype),
        grid_spec=pltpu.PrefetchScalarGridSpec(
            num_scalar_prefetch=0,
            grid=grid,
            in_specs=[
                pl.BlockSpec((bn, c_in, tile_s), lambda b, si: (b, 0, si)),
                pl.BlockSpec((c_out, c_in), lambda b, si: (0, 0)),
            ],
            out_specs=pl.BlockSpec((bn, c_out, tile_s), lambda b, si: (b, 0, si)),
        ),
        compiler_params=pltpu.CompilerParams(
            # Both grid axes are fully independent (elementwise over batch/space).
            dimension_semantics=("parallel", "parallel"),
        ),
        cost_estimate=cost,
    )(x3, weight_oi)

    # (N, C_out, S) -> (N, C_out, H, W): free view.
    return out3.reshape(n, c_out, h, w)


if __name__ == "__main__":
    # Small shapes consistent with the module's forward.
    N, C_IN, C_OUT, H, W = 2, 4, 8, 16, 16

    key = jax.random.PRNGKey(0)
    k_x, k_w = jax.random.split(key)

    x = jax.random.normal(k_x, (N, C_IN, H, W), dtype=jnp.float32)
    # Deterministic "Kaiming-ish" init for the (C_out, C_in, 1, 1) conv weight,
    # squeezed to (C_out, C_in).
    weight = jax.random.normal(k_w, (C_OUT, C_IN), dtype=jnp.float32) * (
        1.0 / jnp.sqrt(C_IN)
    )

    fwd = jax.jit(first_feature_forward)
    out = jax.block_until_ready(fwd(x, weight))

    # Pure-JAX reference of the same math.
    ref = jnp.einsum("nchw,oc->nohw", x, weight)
    ref = jnp.where(ref > 0, ref, 0.01 * ref)
    assert out.shape == (N, C_OUT, H, W)
    assert jnp.allclose(out, ref, atol=1e-5, rtol=1e-5)

    print("KERNEL_OK")
</pallas_src>

<mosaic_0001>
module attributes {stable_mosaic.version = 11 : i64} {
  func.func @_first_feature_kernel(%arg0: i32, %arg1: i32, %arg2: memref<1x4x256xf32, #tpu.memory_space<vmem>>, %arg3: memref<8x4xf32, #tpu.memory_space<vmem>>, %arg4: memref<1x8x256xf32, #tpu.memory_space<vmem>>) attributes {dimension_semantics = [#tpu.dimension_semantics<parallel>, #tpu.dimension_semantics<parallel>], iteration_bounds = array<i64: 2, 1>, scalar_prefetch = 0 : i64, scratch_operands = 0 : i64, tpu.core_type = #tpu.core_type<tc>, window_params = [{transform_indices = @transform_0, window_bounds = array<i64: 1, 4, 256>}, {pipeline_mode = #tpu.pipeline_mode<synchronous>, transform_indices = @transform_1, window_bounds = array<i64: 8, 4>}, {transform_indices = @transform_2, window_bounds = array<i64: 1, 8, 256>}]} {
    %c0 = arith.constant 0 : index
    %c0_0 = arith.constant 0 : index
    %c0_1 = arith.constant 0 : index
    %0 = vector.load %arg2[%c0, %c0_0, %c0_1] : memref<1x4x256xf32, #tpu.memory_space<vmem>>, vector<1x4x256xf32>
    %c0_2 = arith.constant 0 : index
    %c0_3 = arith.constant 0 : index
    %1 = vector.load %arg3[%c0_2, %c0_3] : memref<8x4xf32, #tpu.memory_space<vmem>>, vector<8x4xf32>
    %2 = vector.extract_strided_slice %1 {offsets = [0, 0], sizes = [8, 1], strides = [1, 1]} : vector<8x4xf32> to vector<8x1xf32>
    %3 = vector.shape_cast %2 : vector<8x1xf32> to vector<1x8x1xf32>
    %4 = vector.extract_strided_slice %0 {offsets = [0, 0, 0], sizes = [1, 1, 256], strides = [1, 1, 1]} : vector<1x4x256xf32> to vector<1x1x256xf32>
    %5 = vector.broadcast %3 : vector<1x8x1xf32> to vector<1x8x256xf32>
    %6 = vector.broadcast %4 : vector<1x1x256xf32> to vector<1x8x256xf32>
    %7 = arith.mulf %5, %6 : vector<1x8x256xf32>
    %8 = vector.extract_strided_slice %1 {offsets = [0, 1], sizes = [8, 1], strides = [1, 1]} : vector<8x4xf32> to vector<8x1xf32>
    %9 = vector.shape_cast %8 : vector<8x1xf32> to vector<1x8x1xf32>
    %10 = vector.extract_strided_slice %0 {offsets = [0, 1, 0], sizes = [1, 1, 256], strides = [1, 1, 1]} : vector<1x4x256xf32> to vector<1x1x256xf32>
    %11 = vector.broadcast %9 : vector<1x8x1xf32> to vector<1x8x256xf32>
    %12 = vector.broadcast %10 : vector<1x1x256xf32> to vector<1x8x256xf32>
    %13 = arith.mulf %11, %12 : vector<1x8x256xf32>
    %14 = arith.addf %7, %13 : vector<1x8x256xf32>
    %15 = vector.extract_strided_slice %1 {offsets = [0, 2], sizes = [8, 1], strides = [1, 1]} : vector<8x4xf32> to vector<8x1xf32>
    %16 = vector.shape_cast %15 : vector<8x1xf32> to vector<1x8x1xf32>
    %17 = vector.extract_strided_slice %0 {offsets = [0, 2, 0], sizes = [1, 1, 256], strides = [1, 1, 1]} : vector<1x4x256xf32> to vector<1x1x256xf32>
    %18 = vector.broadcast %16 : vector<1x8x1xf32> to vector<1x8x256xf32>
    %19 = vector.broadcast %17 : vector<1x1x256xf32> to vector<1x8x256xf32>
    %20 = arith.mulf %18, %19 : vector<1x8x256xf32>
    %21 = arith.addf %14, %20 : vector<1x8x256xf32>
    %22 = vector.extract_strided_slice %1 {offsets = [0, 3], sizes = [8, 1], strides = [1, 1]} : vector<8x4xf32> to vector<8x1xf32>
    %23 = vector.shape_cast %22 : vector<8x1xf32> to vector<1x8x1xf32>
    %24 = vector.extract_strided_slice %0 {offsets = [0, 3, 0], sizes = [1, 1, 256], strides = [1, 1, 1]} : vector<1x4x256xf32> to vector<1x1x256xf32>
    %25 = vector.broadcast %23 : vector<1x8x1xf32> to vector<1x8x256xf32>
    %26 = vector.broadcast %24 : vector<1x1x256xf32> to vector<1x8x256xf32>
    %27 = arith.mulf %25, %26 : vector<1x8x256xf32>
    %28 = arith.addf %21, %27 : vector<1x8x256xf32>
    %cst = arith.constant 0.00999999977 : f32
    %29 = vector.broadcast %cst : f32 to vector<1x8x256xf32>
    %30 = arith.mulf %29, %28 : vector<1x8x256xf32>
    %31 = arith.maximumf %28, %30 : vector<1x8x256xf32>
    %c0_4 = arith.constant 0 : index
    %c0_5 = arith.constant 0 : index
    %c0_6 = arith.constant 0 : index
    %32 = vector.load %arg4[%c0_4, %c0_5, %c0_6] : memref<1x8x256xf32, #tpu.memory_space<vmem>>, vector<1x8x256xf32>
    tpu.vector_store %arg4[%c0_4, %c0_5, %c0_6], %31 {strides = array<i32>} : memref<1x8x256xf32, #tpu.memory_space<vmem>>, vector<1x8x256xf32>,
    return
  }
  func.func @transform_0(%arg0: i32, %arg1: i32) -> (i32, i32, i32) {
    %c0_i32 = arith.constant 0 : i32
    %c0_i32_0 = arith.constant 0 : i32
    return %arg0, %c0_i32, %arg1 : i32, i32, i32
  }
  func.func @transform_1(%arg0: i32, %arg1: i32) -> (i32, i32) {
    %c0_i32 = arith.constant 0 : i32
    %c0_i32_0 = arith.constant 0 : i32
    %c0_i32_1 = arith.constant 0 : i32
    return %c0_i32, %c0_i32_0 : i32, i32
  }
  func.func @transform_2(%arg0: i32, %arg1: i32) -> (i32, i32, i32) {
    %c0_i32 = arith.constant 0 : i32
    %c0_i32_0 = arith.constant 0 : i32
    return %arg0, %c0_i32, %arg1 : i32, i32, i32
  }
}

</mosaic_0001>

<llo_original>
// kernel: first_feature_forward.1
$region0: #{first_feature_forward.1}
  #allocation0 [shape = 'u32[]', space=smem, size = 0x4, offset = 0x4, fixed_abs, tag = 'smem constant byte address 0x4 - core index']
  #allocation1 [shape = 'u32[72,128]{1,0:T(1,128)}', space=vmem, size = 0x9000, scoped, tag = 'internal scratch']
  %s0 = inlined_call_operand.vmem [shape: f32[2,4,256], index: 0, kind: input, shape index: {}]
  %s1 = inlined_call_operand.vmem [shape: f32[8,4], index: 1, kind: input, shape index: {}]
  %s2 = inlined_call_operand.vmem [shape: f32[2,8,256], index: 2, kind: output, shape index: {}]
  %s3 = sld [smem:[#allocation0]]
  $region41: #{first_feature_forward.1} parent=0
    _
  %s5 = ssub.s32 1, %s3
  %s6 = scalar_select 0, %s5, %s3
  loop: start=0, step=1, limit=4
  $region2: #{first_feature_forward.1} parent=0 // loop_pre_header
    _
  $region3: #{first_feature_forward.1} parent=0 // loop_header
    %s8 = sphi 0, %s12
    %p9 = scmp.ge.s32.totalorder %s8, 4
    %s15 = sphi 0, %s27
    %s16 = sphi 0, %s23
    %s17 = sphi 0, %s15
    %s18 = sphi 0, %s16
    %s19 = sphi 0, %s17
    %s20 = sphi 0, %s18
    %s32 = sphi 0, %s34
    %s35 = sphi 0, %s32
    %s36 = sphi 0, %s35
    %s52 = sphi 0, %s36
    %s56 = sphi 0, %s56
    %s58 = sphi 0, %s56
    %s59 = sphi 0, %s58
    %s73 = sphi 0, %s59
    %s81 = sphi 0, %s83
    %s84 = sphi 0, %s81
    %s85 = sphi 0, %s84
    %s101 = sphi 0, %s85
  $region4: #{first_feature_forward.1} parent=0 // loop_header_branch
    %11 = sbr.rel (%p9) target = $region8
  $region5: #{first_feature_forward.1} parent=0 // loop_body
    %s13 = ssub.s32 %s8, 1
    %s14 = ssub.s32 %s8, 2
    %s21 = sadd.s32 1, %s16
    %p22 = scmp.ge.s32.totalorder %s21, 1
    %s23 = scalar_select %p22, 0, %s21
    %s24 = sadd.s32 1, %s15
    %s25 = scalar_select %p22, %s24, %s15
    %p26 = scmp.ge.s32.totalorder %s25, 2
    %s27 = scalar_select %p26, 0, %s25
    %s28 = ssub.s32 %s15, %s27
    %s29 = ssub.s32 %s16, %s23
    %s30 = sor.u32 %s28, %s29
    %p31 = scmp.eq.s32.totalorder %s30, 0
    %s33 = sadd.s32 %s32, 1
    %s34 = scalar_select %p31, %s32, %s33
    %p37 = pneg %p31
    %p38 = scmp.eq.s32.totalorder %s8, 1
    %p39 = por %p37, %p38
    %p40 = scmp.ne.s32.totalorder %s32, %s35
    %p41 = scmp.eq.s32.totalorder %s8, 0
    %p42 = por %p40, %p41
    %p43 = scmp.ne.s32.totalorder %s32, %s35
    %p44 = scmp.eq.s32.totalorder %s13, 1
    %p45 = por %p43, %p44
    %p46 = scmp.ne.s32.totalorder %s35, %s36
    %p47 = scmp.eq.s32.totalorder %s13, 0
    %p48 = por %p46, %p47
    %p49 = scmp.ne.s32.totalorder %s35, %s36
    %p50 = scmp.eq.s32.totalorder %s14, 1
    %p51 = por %p49, %p50
    %p53 = scmp.ne.s32.totalorder %s36, %s52
    %p54 = scmp.eq.s32.totalorder %s14, 0
    %p55 = por %p53, %p54
    %s57 = sadd.s32 %s56, 1
    %p60 = scmp.eq.s32.totalorder %s8, 1
    %p61 = scmp.ne.s32.totalorder %s56, %s58
    %p62 = scmp.eq.s32.totalorder %s8, 0
    %p63 = por %p61, %p62
    %p64 = scmp.ne.s32.totalorder %s56, %s58
    %p65 = scmp.eq.s32.totalorder %s13, 1
    %p66 = por %p64, %p65
    %p67 = scmp.ne.s32.totalorder %s58, %s59
    %p68 = scmp.eq.s32.totalorder %s13, 0
    %p69 = por %p67, %p68
    %p70 = scmp.ne.s32.totalorder %s58, %s59
    %p71 = scmp.eq.s32.totalorder %s14, 1
    %p72 = por %p70, %p71
    %p74 = scmp.ne.s32.totalorder %s59, %s73
    %p75 = scmp.eq.s32.totalorder %s14, 0
    %p76 = por %p74, %p75
    %s77 = ssub.s32 %s15, %s27
    %s78 = ssub.s32 %s16, %s23
    %s79 = sor.u32 %s77, %s78
    %p80 = scmp.eq.s32.totalorder %s79, 0
    %s82 = sadd.s32 %s81, 1
    %s83 = scalar_select %p80, %s81, %s82
    %p86 = pneg %p80
    %p87 = scmp.eq.s32.totalorder %s8, 1
    %p88 = por %p86, %p87
    %p89 = scmp.ne.s32.totalorder %s81, %s84
    %p90 = scmp.eq.s32.totalorder %s8, 0
    %p91 = por %p89, %p90
    %p92 = scmp.ne.s32.totalorder %s81, %s84
    %p93 = scmp.eq.s32.totalorder %s13, 1
    %p94 = por %p92, %p93
    %p95 = scmp.ne.s32.totalorder %s84, %s85
    %p96 = scmp.eq.s32.totalorder %s13, 0
    %p97 = por %p95, %p96
    %p98 = scmp.ne.s32.totalorder %s84, %s85
    %p99 = scmp.eq.s32.totalorder %s14, 1
    %p100 = por %p98, %p99
    %p102 = scmp.ne.s32.totalorder %s85, %s101
    %p103 = scmp.eq.s32.totalorder %s14, 0
    %p104 = por %p102, %p103
    %p105 = scmp.le.s32.totalorder 1, %s8
    %p106 = scmp.lt.s32.totalorder %s8, 3
    %p107 = pnand %p105, %p106
    %p108 = pneg %p107
    // Predicated region
    $region9: #{first_feature_forward.1} parent=5 // pred_check
      _
    $region10: #{first_feature_forward.1} parent=5 // pred_check_branch
      %110 = sbr.rel (%p107) target = $region12
    $region11: #{first_feature_forward.1} parent=5 // pred_region
      %s111 = ssub.s32 %s8, 1
      // Predicated region
      $region13: #{first_feature_forward.1} parent=11 // pred_check
        %p112 = pneg %p69
      $region14: #{first_feature_forward.1} parent=11 // pred_check_branch
        %114 = sbr.rel (%p112) target = $region16
      $region15: #{first_feature_forward.1} parent=11 // pred_region
        _
      $region16: #{first_feature_forward.1} parent=11 // pred_fallthru
        _
    $region12: #{first_feature_forward.1} parent=5 // pred_fallthru
      _
    %p115 = scmp.lt.s32.totalorder %s8, 2
    // Predicated region
    $region17: #{first_feature_forward.1} parent=5 // pred_check
      %p116 = pneg %p115
    $region18: #{first_feature_forward.1} parent=5 // pred_check_branch
      %118 = sbr.rel (%p116) target = $region20
    $region19: #{first_feature_forward.1} parent=5 // pred_region
      // Predicated region
      $region21: #{first_feature_forward.1} parent=19 // pred_check
        %p119 = pneg %p42
      $region22: #{first_feature_forward.1} parent=19 // pred_check_branch
        %121 = sbr.rel (%p119) target = $region24
      $region23: #{first_feature_forward.1} parent=19 // pred_region
        %s122 = smul.u32 2, %s16
        %p123 = scmp.lt.s32.totalorder %s15, 1
        %s124 = scalar_select %p123, %s15, 1
        %p125 = scmp.lt.s32.totalorder %s122, 1
        %s126 = scalar_select %p125, %s122, 1
        %s127 = smul.addr %s124, 2
        %s128 = sadd.s32 %s126, %s127
        %s129 = smul.addr %s128, 4
        %s130 = scalar_lea.vmem %s0, %s129
        %s131 = smul.u32 2, %s16
      $region24: #{first_feature_forward.1} parent=19 // pred_fallthru
        _
    $region20: #{first_feature_forward.1} parent=5 // pred_fallthru
      _
    %p132 = scmp.le.s32.totalorder 1, %s8
    %p133 = scmp.lt.s32.totalorder %s8, 3
    %p134 = pnand %p132, %p133
    %p135 = pneg %p134
    // Predicated region
    $region25: #{first_feature_forward.1} parent=5 // pred_check
      _
    $region26: #{first_feature_forward.1} parent=5 // pred_check_branch
      %137 = sbr.rel (%p134) target = $region28
    $region27: #{first_feature_forward.1} parent=5 // pred_region
      %s138 = ssub.s32 %s8, 1
      %s139 = smul.u32 2, %s18
      %p140 = scmp.lt.s32.totalorder %s17, 1
      %s141 = scalar_select %p140, %s17, 1
      %p142 = scmp.lt.s32.totalorder %s139, 1
      %s143 = scalar_select %p142, %s139, 1
      %s144 = smul.addr %s141, 2
      %s145 = sadd.s32 %s143, %s144
      %s146 = smul.addr %s145, 4
      %s147 = scalar_lea.vmem %s0, %s146
      %p148 = pneg %p48
      %p149 = pneg %p45
      %p150 = pneg %p69
      %p151 = pneg %p66
      %p152 = pneg %p97
      %p153 = pneg %p94
      %s154 = smul.u32 2, %s18
      %p155 = scmp.lt.s32.totalorder %s17, 1
      %s156 = scalar_select %p155, %s17, 1
      %p157 = scmp.lt.s32.totalorder %s154, 1
      %s158 = scalar_select %p157, %s154, 1
      %s159 = smul.addr %s156, 2
      %s160 = sadd.s32 %s158, %s159
      %s161 = smul.addr %s160, 8
      %s162 = scalar_lea.vmem %s2, %s161
      %s163 = smul.u32 2, %s18
      %p164 = scmp.lt.s32.totalorder %s17, 1
      %s165 = scalar_select %p164, %s17, 1
      %p166 = scmp.lt.s32.totalorder %s163, 1
      %s167 = scalar_select %p166, %s163, 1
      %s168 = smul.addr %s165, 2
      %s169 = sadd.s32 %s167, %s168
      %s170 = smul.addr %s169, 4
      %s171 = scalar_lea.vmem %s0, %s170
      %s172 = smul.u32 2, %s18
      %s173 = smul.u32 2, %s18
      %p174 = scmp.lt.s32.totalorder %s17, 1
      %s175 = scalar_select %p174, %s17, 1
      %p176 = scmp.lt.s32.totalorder %s173, 1
      %s177 = scalar_select %p176, %s173, 1
      %s178 = smul.addr %s175, 2
      %s179 = sadd.s32 %s177, %s178
      %s180 = smul.addr %s179, 8
      %s181 = scalar_lea.vmem %s2, %s180
      %s182 = smul.u32 2, %s18
      %v183 = vld [vmem:[%s171] sm:$0xff]
      %v184 = vld [vmem:[%s1] sm:$0xff]
      %186 = vset.pattern.permute.xlu0 0
      %187 = vperm.xlu0 %186, %v184
      %v188 = vpop.permute.xlu0 %187
      %v191 = vperm.slane %v183, 0
      %v192 = vperm.slane %v183, 4
      %v195 = vperm.slane %v191, 0
      %v196 = vperm.slane %v192, 0
      %v197 = vmul.f32 %v188, %v195
      %v198 = vmul.f32 %v188, %v196
      %199 = vset.pattern.permute.xlu0 1
      %200 = vperm.xlu0 %199, %v184
      %v201 = vpop.permute.xlu0 %200
      %v203 = vperm.slane %v183, 1
      %v204 = vperm.slane %v183, 5
      %v207 = vperm.slane %v203, 1
      %v208 = vperm.slane %v204, 1
      %v209 = vmul.f32 %v201, %v207
      %v210 = vmul.f32 %v201, %v208
      %v211 = vadd.f32 %v197, %v209
      %v212 = vadd.f32 %v198, %v210
      %213 = vset.pattern.permute.xlu0 2
      %214 = vperm.xlu0 %213, %v184
      %v215 = vpop.permute.xlu0 %214
      %v217 = vperm.slane %v183, 2
      %v218 = vperm.slane %v183, 6
      %v221 = vperm.slane %v217, 2
      %v222 = vperm.slane %v218, 2
      %v223 = vmul.f32 %v215, %v221
      %v224 = vmul.f32 %v215, %v222
      %v225 = vadd.f32 %v211, %v223
      %v226 = vadd.f32 %v212, %v224
      %227 = vset.pattern.permute.xlu0 3
      %228 = vperm.xlu0 %227, %v184
      %v229 = vpop.permute.xlu0 %228
      %v231 = vperm.slane %v183, 3
      %v232 = vperm.slane %v183, 7
      %v235 = vperm.slane %v231, 3
      %v236 = vperm.slane %v232, 3
      %v237 = vmul.f32 %v229, %v235
      %v238 = vmul.f32 %v229, %v236
      %v239 = vadd.f32 %v225, %v237
      %v240 = vadd.f32 %v226, %v238
      %v241 = vmul.f32 %v239, 0.01
      %v242 = vmul.f32 %v240, 0.01
      %v243 = vmax.f32 %v239, %v241
      %v244 = vmax.f32 %v240, %v242
      %245 = vst [vmem:[%s181] sm:$0xff] %v243
      %246 = vst [vmem:[%s181 + $0x8] sm:$0xff] %v244
      %s247 = smul.u32 2, %s18
      %p248 = scmp.lt.s32.totalorder %s17, 1
      %s249 = scalar_select %p248, %s17, 1
      %p250 = scmp.lt.s32.totalorder %s247, 1
      %s251 = scalar_select %p250, %s247, 1
      %s252 = smul.addr %s249, 2
      %s253 = sadd.s32 %s251, %s252
      %s254 = smul.addr %s253, 8
      %s255 = scalar_lea.vmem %s2, %s254
      // Predicated region
      $region29: #{first_feature_forward.1} parent=27 // pred_check
        %p256 = pneg %p94
      $region30: #{first_feature_forward.1} parent=27 // pred_check_branch
        %258 = sbr.rel (%p256) target = $region32
      $region31: #{first_feature_forward.1} parent=27 // pred_region
        %s259 = smul.u32 2, %s18
      $region32: #{first_feature_forward.1} parent=27 // pred_fallthru
        _
    $region28: #{first_feature_forward.1} parent=5 // pred_fallthru
      _
    %p260 = scmp.le.s32.totalorder 2, %s8
    // Predicated region
    $region33: #{first_feature_forward.1} parent=5 // pred_check
      %p261 = pneg %p260
    $region34: #{first_feature_forward.1} parent=5 // pred_check_branch
      %263 = sbr.rel (%p261) target = $region36
    $region35: #{first_feature_forward.1} parent=5 // pred_region
      %s264 = ssub.s32 %s8, 2
      // Predicated region
      $region37: #{first_feature_forward.1} parent=35 // pred_check
        %p265 = pneg %p100
      $region38: #{first_feature_forward.1} parent=35 // pred_check_branch
        %267 = sbr.rel (%p265) target = $region40
      $region39: #{first_feature_forward.1} parent=35 // pred_region
        %s268 = smul.u32 2, %s20
        %p269 = scmp.lt.s32.totalorder %s19, 1
        %s270 = scalar_select %p269, %s19, 1
        %p271 = scmp.lt.s32.totalorder %s268, 1
        %s272 = scalar_select %p271, %s268, 1
        %s273 = smul.addr %s270, 2
        %s274 = sadd.s32 %s272, %s273
        %s275 = smul.addr %s274, 8
        %s276 = scalar_lea.vmem %s2, %s275
      $region40: #{first_feature_forward.1} parent=35 // pred_fallthru
        _
    $region36: #{first_feature_forward.1} parent=5 // pred_fallthru
      _
  $region6: #{first_feature_forward.1} parent=0 // loop_footer
    %s12 = sadd.s32 1, %s8
  $region7: #{first_feature_forward.1} parent=0 // loop_footer_branch
    %7 = sbr.rel target = $region3
  $region8: #{first_feature_forward.1} parent=0 // loop_exit
    _

</llo_original>
